<compile_context>
chip_gen: v7x
topology: tpu7x:2x2x1
jax: 0.10.0
libtpu: 0.0.40
codegen_flags: <defaults>
</compile_context>

<pallas_src>
import jax
import jax.numpy as jnp
from jax.experimental import pallas as pl
from jax.experimental.pallas import tpu as pltpu

EPS = 1e-5

# Packed parameter layout (rows of the (136, 128) f32 buffer):
#   row 0: fc1 weight row [64] (lanes 64:128 zero)
#   row 1: bn1 gamma      [64] (zero-padded)
#   row 2: bn1 beta       [64] (zero-padded)
#   row 3: bn2 gamma      [32] (zero-padded)
#   row 4: bn2 beta       [32] (zero-padded)
#   row 5: fc3 weight row [32] (zero-padded)
#   row 6: fc3 bias at lane 0
#   row 7: unused (keeps w2 sublane-tile aligned)
#   rows 8:136: fc2 weight [64,32] zero-padded to [128,128]
PACKED_ROWS = 136


def _bn_relu(h, gamma, beta):
    # Train-mode BatchNorm1d (biased variance) folded into one per-feature
    # scale/shift, then ReLU.  Two-pass stats for numerical stability.
    mean = jnp.mean(h, axis=0, keepdims=True)                    # [1, 128]
    d = h - mean
    var = jnp.mean(d * d, axis=0, keepdims=True)
    scale = gamma * jax.lax.rsqrt(var + EPS)                     # rsqrt -> EUP slot
    shift = beta - mean * scale
    return jnp.maximum(h * scale + shift, 0.0)


def simple_nn_kernel(x_ref, p_ref, out_ref):
    x = x_ref[...]                                               # [B, 1]

    w1_row = p_ref[0:1, :]                                       # [1, 128]
    g1     = p_ref[1:2, :]
    be1    = p_ref[2:3, :]
    g2     = p_ref[3:4, :]
    be2    = p_ref[4:5, :]
    w3_row = p_ref[5:6, :]
    b3     = p_ref[6:7, 0:1]                                     # [1, 1]
    w2     = p_ref[8:PACKED_ROWS, :]                             # [128, 128]

    # fc1 (K=1): outer product on the VPU (fc1 bias cancelled by BN).
    h1 = x * w1_row                                              # [B, 128]
    h1 = _bn_relu(h1, g1, be1)                                   # padded lanes stay 0

    # fc2: the only real matmul -> full-width MXU push (fc2 bias cancelled by BN).
    h2 = jnp.dot(h1, w2, preferred_element_type=jnp.float32)     # [B, 128]
    h2 = _bn_relu(h2, g2, be2)                                   # padded lanes stay 0

    # fc3 (N=1): VPU multiply + lane reduction (padded lanes contribute 0).
    out = jnp.sum(h2 * w3_row, axis=-1, keepdims=True) + b3      # [B, 1]
    out_ref[...] = out.astype(out_ref.dtype)


def pack_params(params):
    """One-time packing of all parameters into a single (136,128) f32 buffer.

    Built from a handful of pads + one concatenate (no chain of .at[].set()),
    and intended to be hoisted out of the per-call path.
    """
    (w1, b1, g1, be1, w2, b2, g2, be2, w3, b3) = params

    def row(v):
        v = jnp.asarray(v, jnp.float32).reshape(1, -1)
        return jnp.pad(v, ((0, 0), (0, 128 - v.shape[1])))

    header = jnp.concatenate(
        [row(w1), row(g1), row(be1), row(g2), row(be2), row(w3), row(b3),
         jnp.zeros((1, 128), jnp.float32)],
        axis=0)                                                   # [8, 128]
    w2p = jnp.pad(jnp.asarray(w2, jnp.float32),
                  ((0, 128 - w2.shape[0]), (0, 128 - w2.shape[1])))  # [128, 128]
    return jnp.concatenate([header, w2p], axis=0)                 # [136, 128]


@jax.jit
def simple_nn_forward(x, packed):
    B = x.shape[0]
    vmem = pl.BlockSpec(memory_space=pltpu.MemorySpace.VMEM)
    return pl.pallas_call(
        simple_nn_kernel,
        out_shape=jax.ShapeDtypeStruct((B, 1), jnp.float32),
        in_specs=[vmem, vmem],
        out_specs=vmem,
    )(x, packed)


def simple_nn_reference(x, params):
    # Pure-JAX reference with the original (unoptimized) semantics, including
    # fc1/fc2 biases, to verify the kernel.
    (w1, b1, g1, be1, w2, b2, g2, be2, w3, b3) = params

    def bn(h, g, be):
        mean = jnp.mean(h, axis=0, keepdims=True)
        var = jnp.mean((h - mean) ** 2, axis=0, keepdims=True)
        return (h - mean) * jax.lax.rsqrt(var + EPS) * g + be

    h1 = jnp.maximum(bn(x @ w1 + b1, g1, be1), 0.0)
    h2 = jnp.maximum(bn(h1 @ w2 + b2, g2, be2), 0.0)
    return h2 @ w3 + b3


def init_params(key):
    k1, k2, k3, kb1, kb2, kb3 = jax.random.split(key, 6)

    def lin(kw, kb, fan_in, fan_out):
        bound = 1.0 / jnp.sqrt(jnp.float32(fan_in))
        w = jax.random.uniform(kw, (fan_in, fan_out), jnp.float32, -bound, bound)
        b = jax.random.uniform(kb, (1, fan_out), jnp.float32, -bound, bound)
        return w, b

    w1, b1 = lin(k1, kb1, 1, 64)
    w2, b2 = lin(k2, kb2, 64, 32)
    w3, b3 = lin(k3, kb3, 32, 1)
    # BatchNorm affine params: gamma = 1, beta = 0 (PyTorch defaults).
    g1, be1 = jnp.ones((1, 64), jnp.float32), jnp.zeros((1, 64), jnp.float32)
    g2, be2 = jnp.ones((1, 32), jnp.float32), jnp.zeros((1, 32), jnp.float32)
    return (w1, b1, g1, be1, w2, b2, g2, be2, w3, b3)


if __name__ == "__main__":
    key = jax.random.PRNGKey(0)
    kx, kp = jax.random.split(key)
    B = 8
    x = jax.random.normal(kx, (B, 1), jnp.float32)   # (batch, 1 input feature)
    params = init_params(kp)

    # Pack once, outside the per-call path.
    packed = jax.block_until_ready(pack_params(params))

    out = simple_nn_forward(x, packed)
    out = jax.block_until_ready(out)
    assert out.shape == (B, 1) and out.dtype == jnp.float32

    ref = simple_nn_reference(x, params)
    assert jnp.allclose(out, ref, rtol=1e-3, atol=1e-3), (out, ref)
    print("KERNEL_OK")
</pallas_src>

<mosaic_0001>
module attributes {stable_mosaic.version = 11 : i64} {
  func.func @simple_nn_kernel(%arg0: memref<8x1xf32, #tpu.memory_space<vmem>>, %arg1: memref<136x128xf32, #tpu.memory_space<vmem>>, %arg2: memref<8x1xf32, #tpu.memory_space<vmem>>) attributes {dimension_semantics = [], scalar_prefetch = 0 : i64, scratch_operands = 0 : i64, tpu.core_type = #tpu.core_type<tc>} {
    %c0 = arith.constant 0 : index
    %c0_0 = arith.constant 0 : index
    %0 = vector.load %arg0[%c0, %c0_0] : memref<8x1xf32, #tpu.memory_space<vmem>>, vector<8x1xf32>
    %c0_1 = arith.constant 0 : index
    %c0_2 = arith.constant 0 : index
    %1 = vector.load %arg1[%c0_1, %c0_2] : memref<136x128xf32, #tpu.memory_space<vmem>>, vector<1x128xf32>
    %c1 = arith.constant 1 : index
    %c0_3 = arith.constant 0 : index
    %2 = vector.load %arg1[%c1, %c0_3] : memref<136x128xf32, #tpu.memory_space<vmem>>, vector<1x128xf32>
    %c2 = arith.constant 2 : index
    %c0_4 = arith.constant 0 : index
    %3 = vector.load %arg1[%c2, %c0_4] : memref<136x128xf32, #tpu.memory_space<vmem>>, vector<1x128xf32>
    %c3 = arith.constant 3 : index
    %c0_5 = arith.constant 0 : index
    %4 = vector.load %arg1[%c3, %c0_5] : memref<136x128xf32, #tpu.memory_space<vmem>>, vector<1x128xf32>
    %c4 = arith.constant 4 : index
    %c0_6 = arith.constant 0 : index
    %5 = vector.load %arg1[%c4, %c0_6] : memref<136x128xf32, #tpu.memory_space<vmem>>, vector<1x128xf32>
    %c5 = arith.constant 5 : index
    %c0_7 = arith.constant 0 : index
    %6 = vector.load %arg1[%c5, %c0_7] : memref<136x128xf32, #tpu.memory_space<vmem>>, vector<1x128xf32>
    %c6 = arith.constant 6 : index
    %c0_8 = arith.constant 0 : index
    %7 = vector.load %arg1[%c6, %c0_8] : memref<136x128xf32, #tpu.memory_space<vmem>>, vector<1x1xf32>
    %c8 = arith.constant 8 : index
    %c0_9 = arith.constant 0 : index
    %8 = vector.load %arg1[%c8, %c0_9] : memref<136x128xf32, #tpu.memory_space<vmem>>, vector<128x128xf32>
    %9 = vector.broadcast %0 : vector<8x1xf32> to vector<8x128xf32>
    %10 = vector.broadcast %1 : vector<1x128xf32> to vector<8x128xf32>
    %11 = arith.mulf %9, %10 : vector<8x128xf32>
    %cst = arith.constant dense<0.000000e+00> : vector<128xf32>
    %12 = vector.multi_reduction <add>, %11, %cst [0] : vector<8x128xf32> to vector<128xf32>
    %13 = vector.shape_cast %12 : vector<128xf32> to vector<1x128xf32>
    %cst_10 = arith.constant 8.000000e+00 : f32
    %14 = vector.broadcast %cst_10 : f32 to vector<1x128xf32>
    %15 = arith.divf %13, %14 : vector<1x128xf32>
    %16 = vector.broadcast %15 : vector<1x128xf32> to vector<8x128xf32>
    %17 = arith.subf %11, %16 : vector<8x128xf32>
    %18 = arith.mulf %17, %17 : vector<8x128xf32>
    %cst_11 = arith.constant dense<0.000000e+00> : vector<128xf32>
    %19 = vector.multi_reduction <add>, %18, %cst_11 [0] : vector<8x128xf32> to vector<128xf32>
    %20 = vector.shape_cast %19 : vector<128xf32> to vector<1x128xf32>
    %cst_12 = arith.constant 8.000000e+00 : f32
    %21 = vector.broadcast %cst_12 : f32 to vector<1x128xf32>
    %22 = arith.divf %20, %21 : vector<1x128xf32>
    %cst_13 = arith.constant 9.99999974E-6 : f32
    %23 = vector.broadcast %cst_13 : f32 to vector<1x128xf32>
    %24 = arith.addf %22, %23 : vector<1x128xf32>
    %25 = math.rsqrt %24 : vector<1x128xf32>
    %26 = arith.mulf %2, %25 : vector<1x128xf32>
    %27 = arith.mulf %15, %26 : vector<1x128xf32>
    %28 = arith.subf %3, %27 : vector<1x128xf32>
    %29 = vector.broadcast %26 : vector<1x128xf32> to vector<8x128xf32>
    %30 = arith.mulf %11, %29 : vector<8x128xf32>
    %31 = vector.broadcast %28 : vector<1x128xf32> to vector<8x128xf32>
    %32 = arith.addf %30, %31 : vector<8x128xf32>
    %cst_14 = arith.constant 0.000000e+00 : f32
    %33 = vector.broadcast %cst_14 : f32 to vector<8x128xf32>
    %34 = arith.maximumf %32, %33 : vector<8x128xf32>
    %cst_15 = arith.constant dense<0.000000e+00> : vector<8x128xf32>
    %35 = tpu.matmul %34, %8, %cst_15 {dimension_numbers = #tpu.dot_dimension_numbers<[1], [0], [0], [1], [0, 0, 1, 1], [], []>} : vector<8x128xf32>, vector<128x128xf32>, vector<8x128xf32> -> vector<8x128xf32>
    %cst_16 = arith.constant dense<0.000000e+00> : vector<128xf32>
    %36 = vector.multi_reduction <add>, %35, %cst_16 [0] : vector<8x128xf32> to vector<128xf32>
    %37 = vector.shape_cast %36 : vector<128xf32> to vector<1x128xf32>
    %cst_17 = arith.constant 8.000000e+00 : f32
    %38 = vector.broadcast %cst_17 : f32 to vector<1x128xf32>
    %39 = arith.divf %37, %38 : vector<1x128xf32>
    %40 = vector.broadcast %39 : vector<1x128xf32> to vector<8x128xf32>
    %41 = arith.subf %35, %40 : vector<8x128xf32>
    %42 = arith.mulf %41, %41 : vector<8x128xf32>
    %cst_18 = arith.constant dense<0.000000e+00> : vector<128xf32>
    %43 = vector.multi_reduction <add>, %42, %cst_18 [0] : vector<8x128xf32> to vector<128xf32>
    %44 = vector.shape_cast %43 : vector<128xf32> to vector<1x128xf32>
    %cst_19 = arith.constant 8.000000e+00 : f32
    %45 = vector.broadcast %cst_19 : f32 to vector<1x128xf32>
    %46 = arith.divf %44, %45 : vector<1x128xf32>
    %cst_20 = arith.constant 9.99999974E-6 : f32
    %47 = vector.broadcast %cst_20 : f32 to vector<1x128xf32>
    %48 = arith.addf %46, %47 : vector<1x128xf32>
    %49 = math.rsqrt %48 : vector<1x128xf32>
    %50 = arith.mulf %4, %49 : vector<1x128xf32>
    %51 = arith.mulf %39, %50 : vector<1x128xf32>
    %52 = arith.subf %5, %51 : vector<1x128xf32>
    %53 = vector.broadcast %50 : vector<1x128xf32> to vector<8x128xf32>
    %54 = arith.mulf %35, %53 : vector<8x128xf32>
    %55 = vector.broadcast %52 : vector<1x128xf32> to vector<8x128xf32>
    %56 = arith.addf %54, %55 : vector<8x128xf32>
    %cst_21 = arith.constant 0.000000e+00 : f32
    %57 = vector.broadcast %cst_21 : f32 to vector<8x128xf32>
    %58 = arith.maximumf %56, %57 : vector<8x128xf32>
    %59 = vector.broadcast %6 : vector<1x128xf32> to vector<8x128xf32>
    %60 = arith.mulf %58, %59 : vector<8x128xf32>
    %cst_22 = arith.constant dense<0.000000e+00> : vector<8xf32>
    %61 = vector.multi_reduction <add>, %60, %cst_22 [1] : vector<8x128xf32> to vector<8xf32>
    %62 = vector.shape_cast %61 : vector<8xf32> to vector<8x1xf32>
    %63 = vector.broadcast %7 : vector<1x1xf32> to vector<8x1xf32>
    %64 = arith.addf %62, %63 : vector<8x1xf32>
    %c0_23 = arith.constant 0 : index
    %c0_24 = arith.constant 0 : index
    %65 = vector.load %arg2[%c0_23, %c0_24] : memref<8x1xf32, #tpu.memory_space<vmem>>, vector<8x1xf32>
    tpu.vector_store %arg2[%c0_23, %c0_24], %64 {strides = array<i32>} : memref<8x1xf32, #tpu.memory_space<vmem>>, vector<8x1xf32>,
    return
  }
}

</mosaic_0001>

<llo_original>
// kernel: simple_nn_forward.1
$region0: #{simple_nn_forward.1}
  #allocation0 [shape = 'u32[]', space=smem, size = 0x4, offset = 0x4, fixed_abs, tag = 'smem constant byte address 0x4 - core index']
  #allocation1 [shape = 'u32[144,128]{1,0:T(1,128)}', space=vmem, size = 0x12000, scoped, tag = 'internal scratch']
  %s0 = inlined_call_operand.vmem [shape: f32[8,1], index: 0, kind: input, shape index: {}]
  %s1 = inlined_call_operand.hbm [shape: f32[136,128], index: 1, kind: input, shape index: {}]
  %s2 = inlined_call_operand.vmem [shape: f32[8,1], index: 2, kind: output, shape index: {}]
  %s3 = sld [smem:[#allocation0]]
  $region22: #{simple_nn_forward.1} parent=0
    _
  %s5 = ssub.s32 1, %s3
  %s6 = scalar_select 0, %s5, %s3
  $region1: #{simple_nn_forward.1} parent=0
    #allocation2 [shape = 'u8[69632]{0}', space=vmem, size = 0x11000, scoped, tag = 'input window, operand 1, single buffered']
    #allocation3 [shape = 's32[1]{0}', space=sflag, size = 0x4, scoped, tag = 'scoped memory for simple_nn_forward.1']
    %7 = vsyncpa [#allocation3], 0
    // Predicated region
    $region2: #{simple_nn_forward.1} parent=1 // pred_check
      _
    $region3: #{simple_nn_forward.1} parent=1 // pred_check_branch
      %9 = sbr.rel (0) target = $region5
    $region4: #{simple_nn_forward.1} parent=1 // pred_region
      _
    $region5: #{simple_nn_forward.1} parent=1 // pred_fallthru
      _
    // Predicated region
    $region6: #{simple_nn_forward.1} parent=1 // pred_check
      _
    $region7: #{simple_nn_forward.1} parent=1 // pred_check_branch
      %11 = sbr.rel (0) target = $region9
    $region8: #{simple_nn_forward.1} parent=1 // pred_region
      %s13 = ssub.s32 2176, 2176
      %14 = vsyncadd [#allocation3], %s13
      %s15 = sshll.u32 [#allocation2], 4
      %s16 = int_to_ptr.vmem [resolvable:$true] %s15
      %21 = dma.hbm_to_vmem [thread:$0]  %s1, 2176, %s16, [#allocation3], 128, 128, 8
    $region9: #{simple_nn_forward.1} parent=1 // pred_fallthru
      _
    // Predicated region
    $region10: #{simple_nn_forward.1} parent=1 // pred_check
      _
    $region11: #{simple_nn_forward.1} parent=1 // pred_check_branch
      %23 = sbr.rel (0) target = $region13
    $region12: #{simple_nn_forward.1} parent=1 // pred_region
      %24 = dma.done [#allocation3], 2176
    $region13: #{simple_nn_forward.1} parent=1 // pred_fallthru
      _
    %v25 = vld [vmem:[%s0] sm:$0xff]
    %v26 = vld [vmem:[#allocation2] sm:$0x1]
    %v27 = vld [vmem:[#allocation2 + $0x1] sm:$0x1]
    %v28 = vld [vmem:[#allocation2 + $0x2] sm:$0x1]
    %v29 = vld [vmem:[#allocation2 + $0x3] sm:$0x1]
    %v30 = vld [vmem:[#allocation2 + $0x4] sm:$0x1]
    %v31 = vld [vmem:[#allocation2 + $0x5] sm:$0x1]
    %v32 = vld [vmem:[#allocation2 + $0x6] sm:$0x1]
    %v33 = vld [vmem:[#allocation2 + $0x8] sm:$0xff]
    %v34 = vld [vmem:[#allocation2 + $0x10] sm:$0xff]
    %v35 = vld [vmem:[#allocation2 + $0x18] sm:$0xff]
    %v36 = vld [vmem:[#allocation2 + $0x20] sm:$0xff]
    %v37 = vld [vmem:[#allocation2 + $0x28] sm:$0xff]
    %v38 = vld [vmem:[#allocation2 + $0x30] sm:$0xff]
    %v39 = vld [vmem:[#allocation2 + $0x38] sm:$0xff]
    %v40 = vld [vmem:[#allocation2 + $0x40] sm:$0xff]
    %v41 = vld [vmem:[#allocation2 + $0x48] sm:$0xff]
    %v42 = vld [vmem:[#allocation2 + $0x50] sm:$0xff]
    %v43 = vld [vmem:[#allocation2 + $0x58] sm:$0xff]
    %v44 = vld [vmem:[#allocation2 + $0x60] sm:$0xff]
    %v45 = vld [vmem:[#allocation2 + $0x68] sm:$0xff]
    %v46 = vld [vmem:[#allocation2 + $0x70] sm:$0xff]
    %v47 = vld [vmem:[#allocation2 + $0x78] sm:$0xff]
    %v48 = vld [vmem:[#allocation2 + $0x80] sm:$0xff]
    %50 = vset.pattern.permute.xlu0 0
    %51 = vperm.xlu0 %50, %v25
    %v52 = vpop.permute.xlu0 %51
    %v54 = vlaneseq
    %v55 = vshrl.u32 %v54, 7
    %v56 = vsub.s32 0, %v55
    %v57 = vrot.slane %v26, %v56
    %v58 = vmul.f32 %v52, %v57
    %v59 = vrot.slane %v58, 4
    %v60 = vadd.f32 %v58, %v59
    %v61 = vrot.slane %v60, 2
    %v62 = vadd.f32 %v60, %v61
    %v63 = vrot.slane %v62, 1
    %v64 = vadd.f32 %v62, %v63
    %v65 = vrcp.pop 8.0
    %v66 = vmul.f32 %v64, %v65
    %v67 = vsub.f32 %v58, %v66
    %v68 = vmul.f32 %v67, %v67
    %v69 = vrot.slane %v68, 4
    %v70 = vadd.f32 %v68, %v69
    %v71 = vrot.slane %v70, 2
    %v72 = vadd.f32 %v70, %v71
    %v73 = vrot.slane %v72, 1
    %v74 = vadd.f32 %v72, %v73
    %v75 = vmul.f32 %v74, %v65
    %v76 = vadd.f32 %v75, 1e-05
    %v77 = vrsqrt.pop %v76
    %v78 = vmul.f32 %v27, %v77
    %v79 = vmul.f32 %v66, %v78
    %v80 = vsub.f32 %v28, %v79
    %v81 = vlaneseq
    %v82 = vshrl.u32 %v81, 7
    %v83 = vsub.s32 0, %v82
    %v84 = vrot.slane %v78, %v83
    %v85 = vmul.f32 %v58, %v84
    %v86 = vlaneseq
    %v87 = vshrl.u32 %v86, 7
    %v88 = vsub.s32 0, %v87
    %v89 = vrot.slane %v80, %v88
    %v90 = vadd.f32 %v85, %v89
    %v91 = vmax.f32 %v90, 0.0
    %92 = vmatprep.subr.mxu0 0.0
    %93 = vmatpush1.msra.mxu0 %v33
    %94 = vmatprep.subr.mxu0 0.0
    %95 = vmatpush1.msra.mxu0 %v34
    %96 = vmatprep.subr.mxu0 0.0
    %97 = vmatpush1.msra.mxu0 %v35
    %98 = vmatprep.subr.mxu0 0.0
    %99 = vmatpush1.msra.mxu0 %v36
    %100 = vmatprep.subr.mxu0 0.0
    %101 = vmatpush1.msra.mxu0 %v37
    %102 = vmatprep.subr.mxu0 0.0
    %103 = vmatpush1.msra.mxu0 %v38
    %104 = vmatprep.subr.mxu0 0.0
    %105 = vmatpush1.msra.mxu0 %v39
    %106 = vmatprep.subr.mxu0 0.0
    %107 = vmatpush1.msra.mxu0 %v40
    %108 = vmatprep.subr.mxu0 0.0
    %109 = vmatpush1.msra.mxu0 %v41
    %110 = vmatprep.subr.mxu0 0.0
    %111 = vmatpush1.msra.mxu0 %v42
    %112 = vmatprep.subr.mxu0 0.0
    %113 = vmatpush1.msra.mxu0 %v43
    %114 = vmatprep.subr.mxu0 0.0
    %115 = vmatpush1.msra.mxu0 %v44
    %116 = vmatprep.subr.mxu0 0.0
    %117 = vmatpush1.msra.mxu0 %v45
    %118 = vmatprep.subr.mxu0 0.0
    %119 = vmatpush1.msra.mxu0 %v46
    %120 = vmatprep.subr.mxu0 0.0
    %121 = vmatpush1.msra.mxu0 %v47
    %122 = vmatprep.subr.mxu0 0.0
    %123 = vmatpush1.msra.mxu0 %v48
    %124 = vmatprep.subr.mxu0 0.0
    %125 = vmatpush1.msra.mxu0 0.0
    %126 = vmatprep.subr.mxu0 0.0
    %127 = vmatpush1.msra.mxu0 0.0
    %128 = vmatprep.subr.mxu0 0.0
    %129 = vmatpush1.msra.mxu0 0.0
    %130 = vmatprep.subr.mxu0 0.0
    %131 = vmatpush1.msra.mxu0 0.0
    %132 = vmatprep.subr.mxu0 0.0
    %133 = vmatpush1.msra.mxu0 0.0
    %134 = vmatprep.subr.mxu0 0.0
    %135 = vmatpush1.msra.mxu0 0.0
    %136 = vmatprep.subr.mxu0 0.0
    %137 = vmatpush1.msra.mxu0 0.0
    %138 = vmatprep.subr.mxu0 0.0
    %139 = vmatpush1.msra.mxu0 0.0
    %140 = vmatprep.subr.mxu0 0.0
    %141 = vmatpush1.msra.mxu0 0.0
    %142 = vmatprep.subr.mxu0 0.0
    %143 = vmatpush1.msra.mxu0 0.0
    %144 = vmatprep.subr.mxu0 0.0
    %145 = vmatpush1.msra.mxu0 0.0
    %146 = vmatprep.subr.mxu0 0.0
    %147 = vmatpush1.msra.mxu0 0.0
    %148 = vmatprep.subr.mxu0 0.0
    %149 = vmatpush1.msra.mxu0 0.0
    %150 = vmatprep.subr.mxu0 0.0
    %151 = vmatpush1.msra.mxu0 0.0
    %152 = vmatprep.subr.mxu0 0.0
    %153 = vmatpush1.msra.mxu0 0.0
    %154 = vmatprep.subr.mxu0 0.0
    %155 = vmatpush1.msra.mxu0 0.0
    %156 = vmatprep.mubr.f32.mxu0 0.0
    %157 = vmatmul.mubr.f32.gmra.mrb[0].mxu0 %v91
    %v158 = vpop.f32.mrb[0].mxu0
    %v159 = vadd.f32 0.0, %v158
    %v160 = vpop.f32.mrb[0].mxu0
    %161 = vdwg.mxu0
    %v162 = vrot.slane %v159, 4
    %v163 = vadd.f32 %v159, %v162
    %v164 = vrot.slane %v163, 2
    %v165 = vadd.f32 %v163, %v164
    %v166 = vrot.slane %v165, 1
    %v167 = vadd.f32 %v165, %v166
    %v168 = vmul.f32 %v167, %v65
    %v169 = vsub.f32 %v159, %v168
    %v170 = vmul.f32 %v169, %v169
    %v171 = vrot.slane %v170, 4
    %v172 = vadd.f32 %v170, %v171
    %v173 = vrot.slane %v172, 2
    %v174 = vadd.f32 %v172, %v173
    %v175 = vrot.slane %v174, 1
    %v176 = vadd.f32 %v174, %v175
    %v177 = vmul.f32 %v176, %v65
    %v178 = vadd.f32 %v177, 1e-05
    %v179 = vrsqrt.pop %v178
    %v180 = vmul.f32 %v29, %v179
    %v181 = vmul.f32 %v168, %v180
    %v182 = vsub.f32 %v30, %v181
    %v183 = vlaneseq
    %v184 = vshrl.u32 %v183, 7
    %v185 = vsub.s32 0, %v184
    %v186 = vrot.slane %v180, %v185
    %v187 = vmul.f32 %v159, %v186
    %v188 = vlaneseq
    %v189 = vshrl.u32 %v188, 7
    %v190 = vsub.s32 0, %v189
    %v191 = vrot.slane %v182, %v190
    %v192 = vadd.f32 %v187, %v191
    %v193 = vmax.f32 %v192, 0.0
    %v194 = vlaneseq
    %v195 = vshrl.u32 %v194, 7
    %v196 = vsub.s32 0, %v195
    %v197 = vrot.slane %v31, %v196
    %v198 = vmul.f32 %v193, %v197
    %199 = vadd.xlane.f32.xlu0 %v198
    %v200 = vpop.xlane.xlu0 %199
    %v201 = vlaneseq
    %v202 = vshrl.u32 %v201, 7
    %v203 = vsub.s32 0, %v202
    %v204 = vrot.slane %v32, %v203
    %v205 = vadd.f32 %v200, %v204
    %vm206 = vcmask 7168
    %207 = vst.msk [vmem:[%s2] sm:$0xff] %vm206, %v205
    // Predicated region
    $region14: #{simple_nn_forward.1} parent=1 // pred_check
      _
    $region15: #{simple_nn_forward.1} parent=1 // pred_check_branch
      %209 = sbr.rel (0) target = $region17
    $region16: #{simple_nn_forward.1} parent=1 // pred_region
      _
    $region17: #{simple_nn_forward.1} parent=1 // pred_fallthru
      _
    // Predicated region
    $region18: #{simple_nn_forward.1} parent=1 // pred_check
      _
    $region19: #{simple_nn_forward.1} parent=1 // pred_check_branch
      %211 = sbr.rel (0) target = $region21
    $region20: #{simple_nn_forward.1} parent=1 // pred_region
      _
    $region21: #{simple_nn_forward.1} parent=1 // pred_fallthru
      _
    %212 = vsyncpa [#allocation3], 1

</llo_original>
